<compile_context>
chip_gen: v7x
topology: tpu7x:2x2x1
jax: 0.10.0
libtpu: 0.0.40
codegen_flags: <defaults>
</compile_context>

<pallas_src>
import functools

import jax
import jax.numpy as jnp
from jax.experimental import pallas as pl
from jax.experimental.pallas import tpu as pltpu


def _round_up(a, b):
    return ((a + b - 1) // b) * b


def addnorm_kernel(seed_ref, x_ref, y_ref, g_ref, b_ref, o_ref, *,
                   p, training, eps, inv_h, row_tile):
    """One (TR, H) row tile: dropout(Y) + X, LayerNorm over H, scale/shift."""
    x = x_ref[...].astype(jnp.float32)
    y = y_ref[...].astype(jnp.float32)

    if training and p > 0.0:
        # Inverted dropout using a counter-based hash (murmur3 fmix32 style).
        # Portable across TPU generations and interpret mode; distinct stream
        # per element via a globally-unique counter (tile offset + row/col).
        # TODO(synk): bit-stream differs from torch's PRNG; statistically equivalent.
        shape = y.shape
        rows, cols = shape
        tile_row0 = pl.program_id(0).astype(jnp.uint32) * jnp.uint32(row_tile)
        row_ids = jax.lax.broadcasted_iota(jnp.int32, shape, 0).astype(jnp.uint32)
        col_ids = jax.lax.broadcasted_iota(jnp.int32, shape, 1).astype(jnp.uint32)
        ctr = (tile_row0 + row_ids) * jnp.uint32(cols) + col_ids
        seed_u32 = seed_ref[0].astype(jnp.uint32)
        h = ctr ^ (seed_u32 * jnp.uint32(2654435769))      # golden-ratio mix of seed
        h = h ^ (h >> 16)
        h = h * jnp.uint32(2246822507)
        h = h ^ (h >> 13)
        h = h * jnp.uint32(3266489917)
        bits = h ^ (h >> 16)
        thresh = jnp.uint32(min(int(p * 4294967296.0), 4294967295))
        scale = 1.0 / (1.0 - p)
        y = jnp.where(bits >= thresh, y * scale, 0.0)      # single select, no mask temp

    z = x + y
    # Fused single-pass statistics: one sweep for sum(z) and sum(z*z).
    s1 = jnp.sum(z, axis=-1, keepdims=True)
    s2 = jnp.sum(z * z, axis=-1, keepdims=True)
    mean = s1 * inv_h
    var = jnp.maximum(s2 * inv_h - mean * mean, 0.0)       # biased var (PyTorch LN)
    inv = jax.lax.rsqrt(var + eps)
    # gamma/beta are pre-cast to f32 in the wrapper (no per-step recast).
    out = (z - mean) * inv * g_ref[...] + b_ref[...]
    o_ref[...] = out.astype(o_ref.dtype)


def add_norm(x, y, gamma, beta, *, dropout=0.0, training=False, seed=0,
             eps=1e-5, row_tile=512, vmem_budget_bytes=32 * 1024 * 1024):
    assert x.shape == y.shape
    orig_shape = x.shape
    H = orig_shape[-1]
    assert gamma.shape == (H,) and beta.shape == (H,)
    # TODO(synk): for production, H should be a multiple of 128 (lane-dense
    # unmasked stores); small H (like the demo's 32) wastes vreg lanes.

    x2 = x.reshape(-1, H)
    y2 = y.reshape(-1, H)
    rows = x2.shape[0]
    out_dtype = x.dtype
    itemsize = jnp.dtype(out_dtype).itemsize

    # ---- Tile sizing: biggest row tile that fits the VMEM working set. ----
    # Working set = 3 streams (x, y, out), double-buffered.
    bytes_per_row = 3 * 2 * H * itemsize
    max_rt = max(16, (vmem_budget_bytes // bytes_per_row) // 16 * 16)
    rt = min(int(row_tile), int(max_rt), _round_up(rows, 16))
    if rt >= rows and rows >= 32:
        # Keep the grid >= 2 so the parallel axis can shard across 2 TCs (v7x).
        rt = _round_up((rows + 1) // 2, 16)
    rt = max(16, (rt // 16) * 16)        # sublane packing for f32/bf16 I/O

    padded_rows = _round_up(rows, rt)
    if padded_rows != rows:
        pad = padded_rows - rows
        x2 = jnp.pad(x2, ((0, pad), (0, 0)))
        y2 = jnp.pad(y2, ((0, pad), (0, 0)))

    g2 = gamma.astype(jnp.float32).reshape(1, H)
    b2 = beta.astype(jnp.float32).reshape(1, H)
    seed_arr = jnp.array([seed], dtype=jnp.int32)

    kernel = functools.partial(
        addnorm_kernel, p=float(dropout), training=bool(training),
        eps=float(eps), inv_h=1.0 / float(H), row_tile=rt)

    grid = (padded_rows // rt,)
    cost = pl.CostEstimate(
        flops=10 * padded_rows * H,
        transcendentals=padded_rows,                       # one rsqrt per row
        bytes_accessed=3 * padded_rows * H * itemsize)

    out2 = pl.pallas_call(
        kernel,
        out_shape=jax.ShapeDtypeStruct((padded_rows, H), out_dtype),
        grid_spec=pltpu.PrefetchScalarGridSpec(
            num_scalar_prefetch=1,                         # seed -> SMEM
            grid=grid,
            in_specs=[
                pl.BlockSpec((rt, H), lambda i, seed: (i, 0)),   # X tile
                pl.BlockSpec((rt, H), lambda i, seed: (i, 0)),   # Y tile
                pl.BlockSpec((1, H), lambda i, seed: (0, 0)),    # gamma (resident)
                pl.BlockSpec((1, H), lambda i, seed: (0, 0)),    # beta  (resident)
            ],
            out_specs=pl.BlockSpec((rt, H), lambda i, seed: (i, 0)),
        ),
        compiler_params=pltpu.CompilerParams(
            dimension_semantics=("parallel",),
            vmem_limit_bytes=48 * 1024 * 1024),            # > v5e's 16 MiB default,
        cost_estimate=cost,                                 # safe on v7x's 64 MiB VMEM
    )(seed_arr, x2, y2, g2, b2)

    if padded_rows != rows:
        out2 = out2[:rows]
    return out2.reshape(orig_shape)


if __name__ == "__main__":
    B, S, H = 2, 8, 32          # normalized_shape = H = 32
    key = jax.random.PRNGKey(0)
    kx, ky, kg, kb = jax.random.split(key, 4)

    X = jax.random.normal(kx, (B, S, H), dtype=jnp.float32)
    Y = jax.random.normal(ky, (B, S, H), dtype=jnp.float32)
    gamma = 1.0 + 0.1 * jax.random.normal(kg, (H,), dtype=jnp.float32)
    beta = 0.1 * jax.random.normal(kb, (H,), dtype=jnp.float32)

    # Eval-mode forward (dropout is identity), matching module.eval() semantics.
    out = add_norm(X, Y, gamma, beta, dropout=0.5, training=False)
    out = jax.block_until_ready(out)

    # Reference check in plain JAX.
    z = X + Y
    mu = z.mean(-1, keepdims=True)
    var = ((z - mu) ** 2).mean(-1, keepdims=True)
    ref = (z - mu) / jnp.sqrt(var + 1e-5) * gamma + beta
    assert jnp.allclose(out, ref, atol=3e-5, rtol=1e-5), "mismatch vs reference"

    # Training-mode path (in-kernel dropout) runs and stays finite/correct shape.
    out_train = jax.block_until_ready(
        add_norm(X, Y, gamma, beta, dropout=0.5, training=True, seed=123))
    assert out_train.shape == out.shape
    assert bool(jnp.all(jnp.isfinite(out_train)))

    print("KERNEL_OK")
</pallas_src>

<mosaic_0001>
module attributes {stable_mosaic.version = 11 : i64} {
  func.func @addnorm_kernel(%arg0: i32, %arg1: memref<1xi32, #tpu.memory_space<smem>>, %arg2: memref<16x32xf32, #tpu.memory_space<vmem>>, %arg3: memref<16x32xf32, #tpu.memory_space<vmem>>, %arg4: memref<1x32xf32, #tpu.memory_space<vmem>>, %arg5: memref<1x32xf32, #tpu.memory_space<vmem>>, %arg6: memref<16x32xf32, #tpu.memory_space<vmem>>) attributes {dimension_semantics = [#tpu.dimension_semantics<parallel>], iteration_bounds = array<i64: 1>, scalar_prefetch = 1 : i64, scratch_operands = 0 : i64, tpu.core_type = #tpu.core_type<tc>, window_params = [{transform_indices = @transform_0, window_bounds = array<i64: 16, 32>}, {transform_indices = @transform_1, window_bounds = array<i64: 16, 32>}, {pipeline_mode = #tpu.pipeline_mode<synchronous>, transform_indices = @transform_2, window_bounds = array<i64: 1, 32>}, {pipeline_mode = #tpu.pipeline_mode<synchronous>, transform_indices = @transform_3, window_bounds = array<i64: 1, 32>}, {transform_indices = @transform_4, window_bounds = array<i64: 16, 32>}]} {
    %c0 = arith.constant 0 : index
    %c0_0 = arith.constant 0 : index
    %0 = vector.load %arg2[%c0, %c0_0] : memref<16x32xf32, #tpu.memory_space<vmem>>, vector<16x32xf32>
    %c0_1 = arith.constant 0 : index
    %c0_2 = arith.constant 0 : index
    %1 = vector.load %arg3[%c0_1, %c0_2] : memref<16x32xf32, #tpu.memory_space<vmem>>, vector<16x32xf32>
    %2 = arith.addf %0, %1 : vector<16x32xf32>
    %cst = arith.constant dense<0.000000e+00> : vector<16xf32>
    %3 = vector.multi_reduction <add>, %2, %cst [1] : vector<16x32xf32> to vector<16xf32>
    %4 = vector.shape_cast %3 : vector<16xf32> to vector<16x1xf32>
    %5 = arith.mulf %2, %2 : vector<16x32xf32>
    %cst_3 = arith.constant dense<0.000000e+00> : vector<16xf32>
    %6 = vector.multi_reduction <add>, %5, %cst_3 [1] : vector<16x32xf32> to vector<16xf32>
    %7 = vector.shape_cast %6 : vector<16xf32> to vector<16x1xf32>
    %cst_4 = arith.constant 3.125000e-02 : f32
    %8 = vector.broadcast %cst_4 : f32 to vector<16x1xf32>
    %9 = arith.mulf %4, %8 : vector<16x1xf32>
    %cst_5 = arith.constant 3.125000e-02 : f32
    %10 = vector.broadcast %cst_5 : f32 to vector<16x1xf32>
    %11 = arith.mulf %7, %10 : vector<16x1xf32>
    %12 = arith.mulf %9, %9 : vector<16x1xf32>
    %13 = arith.subf %11, %12 : vector<16x1xf32>
    %cst_6 = arith.constant 0.000000e+00 : f32
    %14 = vector.broadcast %cst_6 : f32 to vector<16x1xf32>
    %15 = arith.maximumf %13, %14 : vector<16x1xf32>
    %cst_7 = arith.constant 9.99999974E-6 : f32
    %16 = vector.broadcast %cst_7 : f32 to vector<16x1xf32>
    %17 = arith.addf %15, %16 : vector<16x1xf32>
    %18 = math.rsqrt %17 : vector<16x1xf32>
    %19 = vector.broadcast %9 : vector<16x1xf32> to vector<16x32xf32>
    %20 = arith.subf %2, %19 : vector<16x32xf32>
    %21 = vector.broadcast %18 : vector<16x1xf32> to vector<16x32xf32>
    %22 = arith.mulf %20, %21 : vector<16x32xf32>
    %c0_8 = arith.constant 0 : index
    %c0_9 = arith.constant 0 : index
    %23 = vector.load %arg4[%c0_8, %c0_9] : memref<1x32xf32, #tpu.memory_space<vmem>>, vector<1x32xf32>
    %24 = vector.broadcast %23 : vector<1x32xf32> to vector<16x32xf32>
    %25 = arith.mulf %22, %24 : vector<16x32xf32>
    %c0_10 = arith.constant 0 : index
    %c0_11 = arith.constant 0 : index
    %26 = vector.load %arg5[%c0_10, %c0_11] : memref<1x32xf32, #tpu.memory_space<vmem>>, vector<1x32xf32>
    %27 = vector.broadcast %26 : vector<1x32xf32> to vector<16x32xf32>
    %28 = arith.addf %25, %27 : vector<16x32xf32>
    %c0_12 = arith.constant 0 : index
    %c0_13 = arith.constant 0 : index
    %29 = vector.load %arg6[%c0_12, %c0_13] : memref<16x32xf32, #tpu.memory_space<vmem>>, vector<16x32xf32>
    tpu.vector_store %arg6[%c0_12, %c0_13], %28 {strides = array<i32>} : memref<16x32xf32, #tpu.memory_space<vmem>>, vector<16x32xf32>,
    return
  }
  func.func @transform_0(%arg0: i32, %arg1: memref<1xi32, #tpu.memory_space<smem>>) -> (i32, i32) {
    %c0_i32 = arith.constant 0 : i32
    %c0_i32_0 = arith.constant 0 : i32
    return %arg0, %c0_i32 : i32, i32
  }
  func.func @transform_1(%arg0: i32, %arg1: memref<1xi32, #tpu.memory_space<smem>>) -> (i32, i32) {
    %c0_i32 = arith.constant 0 : i32
    %c0_i32_0 = arith.constant 0 : i32
    return %arg0, %c0_i32 : i32, i32
  }
  func.func @transform_2(%arg0: i32, %arg1: memref<1xi32, #tpu.memory_space<smem>>) -> (i32, i32) {
    %c0_i32 = arith.constant 0 : i32
    %c0_i32_0 = arith.constant 0 : i32
    %c0_i32_1 = arith.constant 0 : i32
    return %c0_i32, %c0_i32_0 : i32, i32
  }
  func.func @transform_3(%arg0: i32, %arg1: memref<1xi32, #tpu.memory_space<smem>>) -> (i32, i32) {
    %c0_i32 = arith.constant 0 : i32
    %c0_i32_0 = arith.constant 0 : i32
    %c0_i32_1 = arith.constant 0 : i32
    return %c0_i32, %c0_i32_0 : i32, i32
  }
  func.func @transform_4(%arg0: i32, %arg1: memref<1xi32, #tpu.memory_space<smem>>) -> (i32, i32) {
    %c0_i32 = arith.constant 0 : i32
    %c0_i32_0 = arith.constant 0 : i32
    return %arg0, %c0_i32 : i32, i32
  }
}

</mosaic_0001>

<llo_original>
// kernel: tpu_custom_call.1
$region0: #{tpu_custom_call.1}
  #allocation0 [shape = 'u32[]', space=smem, size = 0x4, offset = 0x4, fixed_abs, tag = 'smem constant byte address 0x4 - core index']
  #allocation1 [shape = 'u32[144,128]{1,0:T(1,128)}', space=vmem, size = 0x12000, scoped, tag = 'internal scratch']
  #allocation2 [shape = 's32[1]{0}', space=sflag, size = 0x4, scoped, tag = 'scoped memory for tpu_custom_call.1']
  #allocation3 [shape = 's32[1]{0:T(128)S(6)}', space=smem, size = 0x200, scoped, tag = 'prefetched SMEM operand 0']
  %s0 = inlined_call_operand.<no memory space> [shape: s32[1], index: 0, kind: input, shape index: {}]
  %s1 = inlined_call_operand.hbm [shape: f32[16,32], index: 1, kind: input, shape index: {}]
  %s2 = inlined_call_operand.hbm [shape: f32[16,32], index: 2, kind: input, shape index: {}]
  %s3 = inlined_call_operand.vmem [shape: f32[1,32], index: 3, kind: input, shape index: {}]
  %s4 = inlined_call_operand.vmem [shape: f32[1,32], index: 4, kind: input, shape index: {}]
  %s5 = inlined_call_operand.hbm [shape: f32[16,32], index: 5, kind: output, shape index: {}]
  %s6 = sld [smem:[#allocation0]]
  $region34: #{tpu_custom_call.1} parent=0
    _
  %s8 = ssub.s32 1, %s6
  %s9 = scalar_select 0, %s8, %s6
  %10 = sst [smem:[#allocation3]] %s0
  $region1: #{tpu_custom_call.1} parent=0
    #allocation4 [shape = 'u8[8192]{0}', space=vmem, size = 0x2000, scoped, tag = 'input window, operand 1, single buffered']
    #allocation5 [shape = 's32[1]{0}', space=sflag, size = 0x4, scoped, tag = 'scoped memory for tpu_custom_call.1']
    #allocation6 [shape = 's32[1]{0}', space=sflag, size = 0x4, scoped, tag = 'scoped memory for tpu_custom_call.1']
    #allocation7 [shape = 'u8[8192]{0}', space=vmem, size = 0x2000, scoped, tag = 'input window, operand 2, single buffered']
    #allocation8 [shape = 's32[1]{0}', space=sflag, size = 0x4, scoped, tag = 'scoped memory for tpu_custom_call.1']
    #allocation9 [shape = 'u8[8192]{0}', space=vmem, size = 0x2000, scoped, tag = 'output window, operand 0, single buffered']
    %11 = vsyncpa [#allocation5], 0
    %12 = vsyncpa [#allocation8], 0
    %13 = vsyncpa [#allocation6], 0
    // Predicated region
    $region2: #{tpu_custom_call.1} parent=1 // pred_check
      _
    $region3: #{tpu_custom_call.1} parent=1 // pred_check_branch
      %15 = sbr.rel (0) target = $region5
    $region4: #{tpu_custom_call.1} parent=1 // pred_region
      %s17 = ssub.s32 256, 256
      %18 = vsyncadd [#allocation5], %s17
      %s19 = sshll.u32 [#allocation4], 4
      %s20 = int_to_ptr.vmem [resolvable:$true] %s19
      %25 = dma.hbm_to_vmem [thread:$0]  %s1, 256, %s20, [#allocation5], 128, 128, 8
    $region5: #{tpu_custom_call.1} parent=1 // pred_fallthru
      _
    // Predicated region
    $region6: #{tpu_custom_call.1} parent=1 // pred_check
      _
    $region7: #{tpu_custom_call.1} parent=1 // pred_check_branch
      %27 = sbr.rel (0) target = $region9
    $region8: #{tpu_custom_call.1} parent=1 // pred_region
      %s29 = ssub.s32 256, 256
      %30 = vsyncadd [#allocation8], %s29
      %s31 = sshll.u32 [#allocation7], 4
      %s32 = int_to_ptr.vmem [resolvable:$true] %s31
      %37 = dma.hbm_to_vmem [thread:$0]  %s2, 256, %s32, [#allocation8], 128, 128, 8
    $region9: #{tpu_custom_call.1} parent=1 // pred_fallthru
      _
    // Predicated region
    $region10: #{tpu_custom_call.1} parent=1 // pred_check
      _
    $region11: #{tpu_custom_call.1} parent=1 // pred_check_branch
      %39 = sbr.rel (0) target = $region13
    $region12: #{tpu_custom_call.1} parent=1 // pred_region
      _
    $region13: #{tpu_custom_call.1} parent=1 // pred_fallthru
      _
    // Predicated region
    $region14: #{tpu_custom_call.1} parent=1 // pred_check
      _
    $region15: #{tpu_custom_call.1} parent=1 // pred_check_branch
      %41 = sbr.rel (0) target = $region17
    $region16: #{tpu_custom_call.1} parent=1 // pred_region
      _
    $region17: #{tpu_custom_call.1} parent=1 // pred_fallthru
      _
    // Predicated region
    $region18: #{tpu_custom_call.1} parent=1 // pred_check
      _
    $region19: #{tpu_custom_call.1} parent=1 // pred_check_branch
      %43 = sbr.rel (0) target = $region21
    $region20: #{tpu_custom_call.1} parent=1 // pred_region
      %44 = dma.done [#allocation5], 256
    $region21: #{tpu_custom_call.1} parent=1 // pred_fallthru
      _
    // Predicated region
    $region22: #{tpu_custom_call.1} parent=1 // pred_check
      _
    $region23: #{tpu_custom_call.1} parent=1 // pred_check_branch
      %46 = sbr.rel (0) target = $region25
    $region24: #{tpu_custom_call.1} parent=1 // pred_region
      %47 = dma.done [#allocation8], 256
    $region25: #{tpu_custom_call.1} parent=1 // pred_fallthru
      _
    %v48 = vld [vmem:[#allocation4] sm:$0xff]
    %v49 = vld [vmem:[#allocation4 + $0x8] sm:$0xff]
    %v50 = vld [vmem:[#allocation7] sm:$0xff]
    %v51 = vld [vmem:[#allocation7 + $0x8] sm:$0xff]
    %v52 = vadd.f32 %v48, %v50
    %v53 = vadd.f32 %v49, %v51
    %vm54 = vcmask 261120
    %v55 = vsel %vm54, %v52, 0.0
    %56 = vadd.xlane.f32.xlu0 %v55
    %v57 = vpop.xlane.xlu0 %56
    %v58 = vsel %vm54, %v53, 0.0
    %59 = vadd.xlane.f32.xlu0 %v58
    %v60 = vpop.xlane.xlu0 %59
    %v61 = vmul.f32 %v52, %v52
    %v62 = vmul.f32 %v53, %v53
    %v63 = vsel %vm54, %v61, 0.0
    %64 = vadd.xlane.f32.xlu0 %v63
    %v65 = vpop.xlane.xlu0 %64
    %v66 = vsel %vm54, %v62, 0.0
    %67 = vadd.xlane.f32.xlu0 %v66
    %v68 = vpop.xlane.xlu0 %67
    %v69 = vmul.f32 %v57, 0.03125
    %v70 = vmul.f32 %v60, 0.03125
    %v71 = vmul.f32 %v65, 0.03125
    %v72 = vmul.f32 %v68, 0.03125
    %v73 = vmul.f32 %v69, %v69
    %v74 = vmul.f32 %v70, %v70
    %v75 = vsub.f32 %v71, %v73
    %v76 = vsub.f32 %v72, %v74
    %v77 = vmax.f32 %v75, 0.0
    %v78 = vmax.f32 %v76, 0.0
    %v79 = vadd.f32 %v77, 1e-05
    %v80 = vadd.f32 %v78, 1e-05
    %v81 = vrsqrt.pop %v79
    %v82 = vrsqrt.pop %v80
    %v83 = vsub.f32 %v52, %v69
    %v84 = vsub.f32 %v53, %v70
    %v85 = vmul.f32 %v83, %v81
    %v86 = vmul.f32 %v84, %v82
    %v87 = vld [vmem:[%s3] sm:$0x1]
    %v89 = vlaneseq
    %v90 = vshrl.u32 %v89, 7
    %v91 = vsub.s32 0, %v90
    %v92 = vrot.slane %v87, %v91
    %v94 = vmul.f32 %v85, %v92
    %v95 = vmul.f32 %v86, %v92
    %v96 = vld [vmem:[%s4] sm:$0x1]
    %v98 = vlaneseq
    %v99 = vshrl.u32 %v98, 7
    %v100 = vsub.s32 0, %v99
    %v101 = vrot.slane %v96, %v100
    %v103 = vadd.f32 %v94, %v101
    %v104 = vadd.f32 %v95, %v101
    %105 = vst.msk [vmem:[#allocation9] sm:$0xff] %vm54, %v103
    %106 = vst.msk [vmem:[#allocation9 + $0x8] sm:$0xff] %vm54, %v104
    // Predicated region
    $region26: #{tpu_custom_call.1} parent=1 // pred_check
      _
    $region27: #{tpu_custom_call.1} parent=1 // pred_check_branch
      %108 = sbr.rel (0) target = $region29
    $region28: #{tpu_custom_call.1} parent=1 // pred_region
      %s110 = ssub.s32 256, 256
      %111 = vsyncadd [#allocation6], %s110
      %s112 = sshll.u32 [#allocation9], 4
      %s113 = int_to_ptr.vmem [resolvable:$true] %s112
      %118 = dma.vmem_to_hbm [thread:$0]  %s113, 256, %s5, [#allocation6], 128, 128, 8
    $region29: #{tpu_custom_call.1} parent=1 // pred_fallthru
      _
    // Predicated region
    $region30: #{tpu_custom_call.1} parent=1 // pred_check
      _
    $region31: #{tpu_custom_call.1} parent=1 // pred_check_branch
      %120 = sbr.rel (0) target = $region33
    $region32: #{tpu_custom_call.1} parent=1 // pred_region
      %121 = dma.done [#allocation6], 256
    $region33: #{tpu_custom_call.1} parent=1 // pred_fallthru
      _
    %122 = vsyncpa [#allocation5], 1
    %123 = vsyncpa [#allocation8], 1
    %124 = vsyncpa [#allocation6], 1

</llo_original>
